<compile_context>
chip_gen: v7x
topology: tpu7x:2x2x1
jax: 0.10.0
libtpu: 0.0.40
codegen_flags: <defaults>
</compile_context>

<pallas_src>
import jax
import jax.numpy as jnp
from jax.experimental import pallas as pl
from jax.experimental.pallas import tpu as pltpu

IN_FEATURES = 10000
OUT_FEATURES = 65

N_PAD = 128          # lane-dense output / weight columns
TK = 1280            # K tile (multiple of 128)
K_PAD = 10240        # IN_FEATURES rounded up to a multiple of TK
MAX_BM = 256         # max batch tile (rows per grid step)


def _round_up(x, m):
    return (x + m - 1) // m * m


def digit0_kernel(x_ref, w_ref, b_ref, o_ref, acc_ref):
    # x_ref: (bm, TK) bf16   w_ref: (TK, N_PAD) bf16   b_ref: (1, N_PAD) f32
    # o_ref: (bm, N_PAD) f32   acc_ref: (bm, N_PAD) f32
    k = pl.program_id(1)

    @pl.when(k == 0)
    def _():
        acc_ref[...] = jnp.zeros_like(acc_ref)

    acc_ref[...] += jnp.dot(
        x_ref[...], w_ref[...], preferred_element_type=jnp.float32)

    @pl.when(k == pl.num_programs(1) - 1)
    def _():
        logits = acc_ref[...] + b_ref[...]
        h = jnp.maximum(logits, 0.0)                      # relu
        # Exclude the zero-padded columns (>= OUT_FEATURES) from the softmax.
        col = jax.lax.broadcasted_iota(jnp.int32, h.shape, 1)
        h = jnp.where(col < OUT_FEATURES, h, -jnp.inf)
        m = jnp.max(h, axis=1, keepdims=True)             # stable log_softmax
        s = h - m
        lse = jnp.log(jnp.sum(jnp.exp(s), axis=1, keepdims=True))
        o_ref[...] = s - lse


def digit0_forward(x_nchw, w, b):
    # Flatten exactly like x.view(-1, 10000)
    x = x_nchw.reshape(-1, IN_FEATURES)
    B = x.shape[0]

    # Batch tiling: full sublanes, bounded working set, parallel axis for v7x.
    bm = min(MAX_BM, _round_up(B, 8))
    b_pad = _round_up(B, bm)

    # Pad + quantize operands (zero-padding along K is a mathematical identity).
    x_p = jnp.pad(x.astype(jnp.float32),
                  ((0, b_pad - B), (0, K_PAD - IN_FEATURES))).astype(jnp.bfloat16)
    w_p = jnp.pad(w.astype(jnp.float32),
                  ((0, K_PAD - IN_FEATURES), (0, N_PAD - OUT_FEATURES))
                  ).astype(jnp.bfloat16)
    b_p = jnp.pad(b.reshape(1, OUT_FEATURES).astype(jnp.float32),
                  ((0, 0), (0, N_PAD - OUT_FEATURES)))

    grid = (b_pad // bm, K_PAD // TK)

    cost = pl.CostEstimate(
        flops=2 * b_pad * K_PAD * N_PAD,
        transcendentals=b_pad * N_PAD,
        bytes_accessed=(x_p.size * 2 + w_p.size * 2 + b_p.size * 4
                        + b_pad * N_PAD * 4),
    )

    out = pl.pallas_call(
        digit0_kernel,
        out_shape=jax.ShapeDtypeStruct((b_pad, N_PAD), jnp.float32),
        grid=grid,
        in_specs=[
            pl.BlockSpec((bm, TK), lambda i, k: (i, k)),      # x tile
            pl.BlockSpec((TK, N_PAD), lambda i, k: (k, 0)),   # W tile
            pl.BlockSpec((1, N_PAD), lambda i, k: (0, 0)),    # bias (resident)
        ],
        out_specs=pl.BlockSpec((bm, N_PAD), lambda i, k: (i, 0)),
        scratch_shapes=[pltpu.VMEM((bm, N_PAD), jnp.float32)],
        compiler_params=pltpu.CompilerParams(
            dimension_semantics=("parallel", "arbitrary")),
        cost_estimate=cost,
    )(x_p, w_p, b_p)

    # Drop batch / column padding.
    return out[:B, :OUT_FEATURES]


if __name__ == "__main__":
    key = jax.random.PRNGKey(0)
    kx, kw, kb = jax.random.split(key, 3)

    # Small batch; spatial 100x100x1 so that view(-1, 10000) matches fc1.
    B = 2
    x = jax.random.normal(kx, (B, 1, 100, 100), dtype=jnp.float32)

    # Deterministic synthetic parameters (Linear(10000, 65)).
    bound = 1.0 / jnp.sqrt(jnp.float32(IN_FEATURES))
    w = jax.random.uniform(kw, (IN_FEATURES, OUT_FEATURES),
                           dtype=jnp.float32, minval=-bound, maxval=bound)
    b = jax.random.uniform(kb, (OUT_FEATURES,),
                           dtype=jnp.float32, minval=-bound, maxval=bound)

    out = digit0_forward(x, w, b)
    out = jax.block_until_ready(out)
    assert out.shape == (B, OUT_FEATURES)

    # Reference with matching bf16 inputs / f32 accumulation (tight tolerance).
    xb = x.reshape(-1, IN_FEATURES).astype(jnp.bfloat16)
    wb = w.astype(jnp.bfloat16)
    logits_ref = jnp.dot(xb, wb, preferred_element_type=jnp.float32) + b
    ref_bf16 = jax.nn.log_softmax(jnp.maximum(logits_ref, 0.0), axis=1)
    assert jnp.allclose(out, ref_bf16, atol=1e-2, rtol=1e-2)

    # Loose sanity check against the full-f32 reference (bf16 weight quant).
    ref_f32 = jax.nn.log_softmax(
        jnp.maximum(x.reshape(-1, IN_FEATURES) @ w + b, 0.0), axis=1)
    assert jnp.allclose(out, ref_f32, atol=5e-2, rtol=5e-2)

    print("KERNEL_OK")
</pallas_src>

<mosaic_0001>
module attributes {stable_mosaic.version = 11 : i64} {
  func.func @digit0_kernel(%arg0: i32, %arg1: i32, %arg2: memref<8x1280xbf16, #tpu.memory_space<vmem>>, %arg3: memref<1280x128xbf16, #tpu.memory_space<vmem>>, %arg4: memref<1x128xf32, #tpu.memory_space<vmem>>, %arg5: memref<8x128xf32, #tpu.memory_space<vmem>>, %arg6: memref<8x128xf32, #tpu.memory_space<vmem>>) attributes {dimension_semantics = [#tpu.dimension_semantics<parallel>, #tpu.dimension_semantics<arbitrary>], iteration_bounds = array<i64: 1, 8>, scalar_prefetch = 0 : i64, scratch_operands = 1 : i64, tpu.core_type = #tpu.core_type<tc>, window_params = [{transform_indices = @transform_0, window_bounds = array<i64: 8, 1280>}, {transform_indices = @transform_1, window_bounds = array<i64: 1280, 128>}, {pipeline_mode = #tpu.pipeline_mode<synchronous>, transform_indices = @transform_2, window_bounds = array<i64: 1, 128>}, {transform_indices = @transform_3, window_bounds = array<i64: 8, 128>}]} {
    %c0_i32 = arith.constant 0 : i32
    %0 = arith.cmpi eq, %arg1, %c0_i32 : i32
    %1 = arith.extui %0 : i1 to i32
    %c0_i32_0 = arith.constant 0 : i32
    %2 = arith.cmpi ne, %1, %c0_i32_0 : i32
    scf.if %2 {
      %cst_9 = arith.constant 0.000000e+00 : f32
      %12 = vector.broadcast %cst_9 : f32 to vector<8x128xf32>
      %c0_10 = arith.constant 0 : index
      %c0_11 = arith.constant 0 : index
      %13 = vector.load %arg6[%c0_10, %c0_11] : memref<8x128xf32, #tpu.memory_space<vmem>>, vector<8x128xf32>
      tpu.vector_store %arg6[%c0_10, %c0_11], %12 {strides = array<i32>} : memref<8x128xf32, #tpu.memory_space<vmem>>, vector<8x128xf32>,
    } else {
    }
    %c0 = arith.constant 0 : index
    %c0_1 = arith.constant 0 : index
    %3 = vector.load %arg6[%c0, %c0_1] : memref<8x128xf32, #tpu.memory_space<vmem>>, vector<8x128xf32>
    %c0_2 = arith.constant 0 : index
    %c0_3 = arith.constant 0 : index
    %4 = vector.load %arg2[%c0_2, %c0_3] : memref<8x1280xbf16, #tpu.memory_space<vmem>>, vector<8x1280xbf16>
    %c0_4 = arith.constant 0 : index
    %c0_5 = arith.constant 0 : index
    %5 = vector.load %arg3[%c0_4, %c0_5] : memref<1280x128xbf16, #tpu.memory_space<vmem>>, vector<1280x128xbf16>
    %cst = arith.constant dense<0.000000e+00> : vector<8x128xf32>
    %6 = tpu.matmul %4, %5, %cst {dimension_numbers = #tpu.dot_dimension_numbers<[1], [0], [0], [1], [0, 0, 1, 1], [], []>} : vector<8x1280xbf16>, vector<1280x128xbf16>, vector<8x128xf32> -> vector<8x128xf32>
    %7 = arith.addf %3, %6 : vector<8x128xf32>
    %c0_6 = arith.constant 0 : index
    %c0_7 = arith.constant 0 : index
    %8 = vector.load %arg6[%c0_6, %c0_7] : memref<8x128xf32, #tpu.memory_space<vmem>>, vector<8x128xf32>
    tpu.vector_store %arg6[%c0_6, %c0_7], %7 {strides = array<i32>} : memref<8x128xf32, #tpu.memory_space<vmem>>, vector<8x128xf32>,
    %c7_i32 = arith.constant 7 : i32
    %9 = arith.cmpi eq, %arg1, %c7_i32 : i32
    %10 = arith.extui %9 : i1 to i32
    %c0_i32_8 = arith.constant 0 : i32
    %11 = arith.cmpi ne, %10, %c0_i32_8 : i32
    scf.if %11 {
      %c0_9 = arith.constant 0 : index
      %c0_10 = arith.constant 0 : index
      %12 = vector.load %arg6[%c0_9, %c0_10] : memref<8x128xf32, #tpu.memory_space<vmem>>, vector<8x128xf32>
      %c0_11 = arith.constant 0 : index
      %c0_12 = arith.constant 0 : index
      %13 = vector.load %arg4[%c0_11, %c0_12] : memref<1x128xf32, #tpu.memory_space<vmem>>, vector<1x128xf32>
      %14 = vector.broadcast %13 : vector<1x128xf32> to vector<8x128xf32>
      %15 = arith.addf %12, %14 : vector<8x128xf32>
      %cst_13 = arith.constant 0.000000e+00 : f32
      %16 = vector.broadcast %cst_13 : f32 to vector<8x128xf32>
      %17 = arith.maximumf %15, %16 : vector<8x128xf32>
      %18 = tpu.iota {dimensions = array<i32: 1>} : vector<8x128xi32>
      %c65_i32 = arith.constant 65 : i32
      %19 = vector.broadcast %c65_i32 : i32 to vector<8x128xi32>
      %20 = arith.cmpi slt, %18, %19 : vector<8x128xi32>
      %cst_14 = arith.constant 0xFF800000 : f32
      %21 = vector.broadcast %cst_14 : f32 to vector<8x128xf32>
      %22 = arith.select %20, %17, %21 : vector<8x128xi1>, vector<8x128xf32>
      %cst_15 = arith.constant dense<0xFF800000> : vector<8xf32>
      %23 = vector.multi_reduction <maximumf>, %22, %cst_15 [1] : vector<8x128xf32> to vector<8xf32>
      %24 = vector.shape_cast %23 : vector<8xf32> to vector<8x1xf32>
      %25 = vector.broadcast %24 : vector<8x1xf32> to vector<8x128xf32>
      %26 = arith.subf %22, %25 : vector<8x128xf32>
      %27 = math.exp %26 : vector<8x128xf32>
      %cst_16 = arith.constant dense<0.000000e+00> : vector<8xf32>
      %28 = vector.multi_reduction <add>, %27, %cst_16 [1] : vector<8x128xf32> to vector<8xf32>
      %29 = vector.shape_cast %28 : vector<8xf32> to vector<8x1xf32>
      %30 = math.log %29 : vector<8x1xf32>
      %31 = vector.broadcast %30 : vector<8x1xf32> to vector<8x128xf32>
      %32 = arith.subf %26, %31 : vector<8x128xf32>
      %c0_17 = arith.constant 0 : index
      %c0_18 = arith.constant 0 : index
      %33 = vector.load %arg5[%c0_17, %c0_18] : memref<8x128xf32, #tpu.memory_space<vmem>>, vector<8x128xf32>
      tpu.vector_store %arg5[%c0_17, %c0_18], %32 {strides = array<i32>} : memref<8x128xf32, #tpu.memory_space<vmem>>, vector<8x128xf32>,
    } else {
    }
    return
  }
  func.func @transform_0(%arg0: i32, %arg1: i32) -> (i32, i32) {
    %c0_i32 = arith.constant 0 : i32
    return %arg0, %arg1 : i32, i32
  }
  func.func @transform_1(%arg0: i32, %arg1: i32) -> (i32, i32) {
    %c0_i32 = arith.constant 0 : i32
    %c0_i32_0 = arith.constant 0 : i32
    return %arg1, %c0_i32 : i32, i32
  }
  func.func @transform_2(%arg0: i32, %arg1: i32) -> (i32, i32) {
    %c0_i32 = arith.constant 0 : i32
    %c0_i32_0 = arith.constant 0 : i32
    %c0_i32_1 = arith.constant 0 : i32
    return %c0_i32, %c0_i32_0 : i32, i32
  }
  func.func @transform_3(%arg0: i32, %arg1: i32) -> (i32, i32) {
    %c0_i32 = arith.constant 0 : i32
    %c0_i32_0 = arith.constant 0 : i32
    return %arg0, %c0_i32 : i32, i32
  }
}

</mosaic_0001>

<llo_original>
// kernel: tpu_custom_call.1
$region0: #{tpu_custom_call.1}
  #allocation0 [shape = 'u32[]', space=smem, size = 0x4, offset = 0x4, fixed_abs, tag = 'smem constant byte address 0x4 - core index']
  #allocation1 [shape = 'u32[144,128]{1,0:T(1,128)}', space=vmem, size = 0x12000, scoped, tag = 'internal scratch']
  #allocation2 [shape = 'f32[8,128]{1,0:T(8,128)}', space=vmem, size = 0x1000, scoped, tag = 'scratch operand']
  %s0 = inlined_call_operand.hbm [shape: bf16[8,10240], index: 0, kind: input, shape index: {}]
  %s1 = inlined_call_operand.hbm [shape: bf16[10240,128], index: 1, kind: input, shape index: {}]
  %s2 = inlined_call_operand.hbm [shape: f32[1,128], index: 2, kind: input, shape index: {}]
  %s3 = inlined_call_operand.hbm [shape: f32[8,128], index: 3, kind: output, shape index: {}]
  %s4 = sld [smem:[#allocation0]]
  $region65: #{tpu_custom_call.1} parent=0
    _
  %s6 = ssub.s32 1, %s4
  %s7 = scalar_select 0, %s6, %s4
  $region1: #{tpu_custom_call.1} parent=0
    #allocation3 [shape = 'u8[40960]{0}', space=vmem, size = 0xa000, scoped, tag = 'input window, operand 0']
    #allocation4 [shape = 's32[2]{0}', space=sflag, size = 0x8, scoped, tag = 'scoped memory for tpu_custom_call.1']
    #allocation5 [shape = 's32[2]{0}', space=sflag, size = 0x8, scoped, tag = 'scoped memory for tpu_custom_call.1']
    #allocation6 [shape = 'u8[655360]{0}', space=vmem, size = 0xa0000, scoped, tag = 'input window, operand 1']
    #allocation7 [shape = 's32[2]{0}', space=sflag, size = 0x8, scoped, tag = 'scoped memory for tpu_custom_call.1']
    #allocation8 [shape = 'u8[512]{0}', space=vmem, size = 0x400, scoped, tag = 'input window, operand 2, single buffered']
    #allocation9 [shape = 'u8[4096]{0}', space=vmem, size = 0x1000, scoped, tag = 'output window, operand 0, single buffered']
    %8 = vsyncpa [#allocation4], 0
    %s9 = scalar_lea.sflag [#allocation4], 1
    %10 = vsyncpa %s9, 0
    %11 = vsyncpa [#allocation7], 0
    %s12 = scalar_lea.sflag [#allocation7], 1
    %13 = vsyncpa %s12, 0
    %14 = vsyncpa [#allocation5], 0
    loop: start=0, step=1, limit=10
    $region2: #{tpu_custom_call.1} parent=1 // loop_pre_header
      _
    $region3: #{tpu_custom_call.1} parent=1 // loop_header
      %s16 = sphi 0, %s20
      %p17 = scmp.ge.s32.totalorder %s16, 10
      %s23 = sphi 0, %s35
      %s24 = sphi 0, %s31
      %s25 = sphi 0, %s23
      %s26 = sphi 0, %s24
      %s27 = sphi 0, %s25
      %s28 = sphi 0, %s26
      %s40 = sphi 0, %s42
      %s43 = sphi 0, %s40
      %s44 = sphi 0, %s43
      %s60 = sphi 0, %s44
      %s66 = sphi 0, %s68
      %s69 = sphi 0, %s66
      %s70 = sphi 0, %s69
      %s86 = sphi 0, %s70
      %s90 = sphi 0, %s90
      %s92 = sphi 0, %s90
      %s93 = sphi 0, %s92
      %s107 = sphi 0, %s93
      %s113 = sphi 0, %s115
      %s116 = sphi 0, %s113
      %s117 = sphi 0, %s116
      %s133 = sphi 0, %s117
    $region4: #{tpu_custom_call.1} parent=1 // loop_header_branch
      %19 = sbr.rel (%p17) target = $region8
    $region5: #{tpu_custom_call.1} parent=1 // loop_body
      %s21 = ssub.s32 %s16, 1
      %s22 = ssub.s32 %s16, 2
      %s29 = sadd.s32 1, %s24
      %p30 = scmp.ge.s32.totalorder %s29, 8
      %s31 = scalar_select %p30, 0, %s29
      %s32 = sadd.s32 1, %s23
      %s33 = scalar_select %p30, %s32, %s23
      %p34 = scmp.ge.s32.totalorder %s33, 1
      %s35 = scalar_select %p34, 0, %s33
      %s36 = ssub.s32 %s23, %s35
      %s37 = ssub.s32 %s24, %s31
      %s38 = sor.u32 %s36, %s37
      %p39 = scmp.eq.s32.totalorder %s38, 0
      %s41 = sadd.s32 %s40, 1
      %s42 = scalar_select %p39, %s40, %s41
      %p45 = pneg %p39
      %p46 = scmp.eq.s32.totalorder %s16, 7
      %p47 = por %p45, %p46
      %p48 = scmp.ne.s32.totalorder %s40, %s43
      %p49 = scmp.eq.s32.totalorder %s16, 0
      %p50 = por %p48, %p49
      %p51 = scmp.ne.s32.totalorder %s40, %s43
      %p52 = scmp.eq.s32.totalorder %s21, 7
      %p53 = por %p51, %p52
      %p54 = scmp.ne.s32.totalorder %s43, %s44
      %p55 = scmp.eq.s32.totalorder %s21, 0
      %p56 = por %p54, %p55
      %p57 = scmp.ne.s32.totalorder %s43, %s44
      %p58 = scmp.eq.s32.totalorder %s22, 7
      %p59 = por %p57, %p58
      %p61 = scmp.ne.s32.totalorder %s44, %s60
      %p62 = scmp.eq.s32.totalorder %s22, 0
      %p63 = por %p61, %p62
      %s64 = ssub.s32 %s24, %s31
      %p65 = scmp.eq.s32.totalorder %s64, 0
      %s67 = sadd.s32 %s66, 1
      %s68 = scalar_select %p65, %s66, %s67
      %p71 = pneg %p65
      %p72 = scmp.eq.s32.totalorder %s16, 7
      %p73 = por %p71, %p72
      %p74 = scmp.ne.s32.totalorder %s66, %s69
      %p75 = scmp.eq.s32.totalorder %s16, 0
      %p76 = por %p74, %p75
      %p77 = scmp.ne.s32.totalorder %s66, %s69
      %p78 = scmp.eq.s32.totalorder %s21, 7
      %p79 = por %p77, %p78
      %p80 = scmp.ne.s32.totalorder %s69, %s70
      %p81 = scmp.eq.s32.totalorder %s21, 0
      %p82 = por %p80, %p81
      %p83 = scmp.ne.s32.totalorder %s69, %s70
      %p84 = scmp.eq.s32.totalorder %s22, 7
      %p85 = por %p83, %p84
      %p87 = scmp.ne.s32.totalorder %s70, %s86
      %p88 = scmp.eq.s32.totalorder %s22, 0
      %p89 = por %p87, %p88
      %s91 = sadd.s32 %s90, 1
      %p94 = scmp.eq.s32.totalorder %s16, 7
      %p95 = scmp.ne.s32.totalorder %s90, %s92
      %p96 = scmp.eq.s32.totalorder %s16, 0
      %p97 = por %p95, %p96
      %p98 = scmp.ne.s32.totalorder %s90, %s92
      %p99 = scmp.eq.s32.totalorder %s21, 7
      %p100 = por %p98, %p99
      %p101 = scmp.ne.s32.totalorder %s92, %s93
      %p102 = scmp.eq.s32.totalorder %s21, 0
      %p103 = por %p101, %p102
      %p104 = scmp.ne.s32.totalorder %s92, %s93
      %p105 = scmp.eq.s32.totalorder %s22, 7
      %p106 = por %p104, %p105
      %p108 = scmp.ne.s32.totalorder %s93, %s107
      %p109 = scmp.eq.s32.totalorder %s22, 0
      %p110 = por %p108, %p109
      %s111 = ssub.s32 %s23, %s35
      %p112 = scmp.eq.s32.totalorder %s111, 0
      %s114 = sadd.s32 %s113, 1
      %s115 = scalar_select %p112, %s113, %s114
      %p118 = pneg %p112
      %p119 = scmp.eq.s32.totalorder %s16, 7
      %p120 = por %p118, %p119
      %p121 = scmp.ne.s32.totalorder %s113, %s116
      %p122 = scmp.eq.s32.totalorder %s16, 0
      %p123 = por %p121, %p122
      %p124 = scmp.ne.s32.totalorder %s113, %s116
      %p125 = scmp.eq.s32.totalorder %s21, 7
      %p126 = por %p124, %p125
      %p127 = scmp.ne.s32.totalorder %s116, %s117
      %p128 = scmp.eq.s32.totalorder %s21, 0
      %p129 = por %p127, %p128
      %p130 = scmp.ne.s32.totalorder %s116, %s117
      %p131 = scmp.eq.s32.totalorder %s22, 7
      %p132 = por %p130, %p131
      %p134 = scmp.ne.s32.totalorder %s117, %s133
      %p135 = scmp.eq.s32.totalorder %s22, 0
      %p136 = por %p134, %p135
      %p137 = scmp.le.s32.totalorder 1, %s16
      %p138 = scmp.lt.s32.totalorder %s16, 9
      %p139 = pnand %p137, %p138
      %p140 = pneg %p139
      // Predicated region
      $region9: #{tpu_custom_call.1} parent=5 // pred_check
        _
      $region10: #{tpu_custom_call.1} parent=5 // pred_check_branch
        %142 = sbr.rel (%p139) target = $region12
      $region11: #{tpu_custom_call.1} parent=5 // pred_region
        %s143 = ssub.s32 %s16, 1
        // Predicated region
        $region13: #{tpu_custom_call.1} parent=11 // pred_check
          %p144 = pneg %p103
        $region14: #{tpu_custom_call.1} parent=11 // pred_check_branch
          %146 = sbr.rel (%p144) target = $region16
        $region15: #{tpu_custom_call.1} parent=11 // pred_region
          %s148 = ssub.s32 16, 16
          %149 = vsyncadd [#allocation7], %s148
          %s151 = sshll.u32 [#allocation8], 4
          %s152 = int_to_ptr.vmem [resolvable:$true] %s151
          %154 = dma.hbm_to_vmem [thread:$0]  %s2, 16, %s152, [#allocation7]
        $region16: #{tpu_custom_call.1} parent=11 // pred_fallthru
          _
      $region12: #{tpu_custom_call.1} parent=5 // pred_fallthru
        _
      %p155 = scmp.lt.s32.totalorder %s16, 8
      // Predicated region
      $region17: #{tpu_custom_call.1} parent=5 // pred_check
        %p156 = pneg %p155
      $region18: #{tpu_custom_call.1} parent=5 // pred_check_branch
        %158 = sbr.rel (%p156) target = $region20
      $region19: #{tpu_custom_call.1} parent=5 // pred_region
        // Predicated region
        $region21: #{tpu_custom_call.1} parent=19 // pred_check
          %p159 = pneg %p50
        $region22: #{tpu_custom_call.1} parent=19 // pred_check_branch
          %161 = sbr.rel (%p159) target = $region24
        $region23: #{tpu_custom_call.1} parent=19 // pred_region
          %s162 = sand.u32 %s40, 1
          %s163 = scalar_lea.sflag [#allocation4], %s162
          %s164 = sand.u32 %s40, 1
          %s165 = smul.addr %s164, 40
          %s166 = scalar_lea.vmem [#allocation3], %s165
          %s167 = smul.u32 10, %s24
          %s169 = ssub.s32 640, 640
          %170 = vsyncadd %s163, %s169
          %s171 = smul.addr %s23, 80
          %s172 = sadd.s32 %s167, %s171
          %s173 = smul.addr %s172, 64
          %s174 = scalar_lea.hbm %s0, %s173
          %s176 = sshll.u32 %s166, 4
          %s177 = int_to_ptr.vmem [resolvable:$true] %s176
          %179 = dma.hbm_to_vmem [thread:$0]  %s174, 640, %s177, %s163
        $region24: #{tpu_custom_call.1} parent=19 // pred_fallthru
          _
        // Predicated region
        $region25: #{tpu_custom_call.1} parent=19 // pred_check
          %p180 = pneg %p76
        $region26: #{tpu_custom_call.1} parent=19 // pred_check_branch
          %182 = sbr.rel (%p180) target = $region28
        $region27: #{tpu_custom_call.1} parent=19 // pred_region
          %s183 = sand.u32 %s16, 1
          %s184 = scalar_lea.sflag [#allocation7], %s183
          %s185 = sand.u32 %s66, 1
          %s186 = smul.addr %s185, 640
          %s187 = scalar_lea.vmem [#allocation6], %s186
          %s188 = smul.u32 160, %s24
          %s190 = ssub.s32 10240, 10240
          %191 = vsyncadd %s184, %s190
          %s192 = smul.addr %s188, 64
          %s193 = scalar_lea.hbm %s1, %s192
          %s194 = sshll.u32 %s187, 4
          %s195 = int_to_ptr.vmem [resolvable:$true] %s194
          %200 = dma.hbm_to_vmem [thread:$0]  %s193, 10240, %s195, %s184, 64, 64, 4
        $region28: #{tpu_custom_call.1} parent=19 // pred_fallthru
          _
      $region20: #{tpu_custom_call.1} parent=5 // pred_fallthru
        _
      %p201 = scmp.le.s32.totalorder 1, %s16
      %p202 = scmp.lt.s32.totalorder %s16, 9
      %p203 = pnand %p201, %p202
      %p204 = pneg %p203
      // Predicated region
      $region29: #{tpu_custom_call.1} parent=5 // pred_check
        _
      $region30: #{tpu_custom_call.1} parent=5 // pred_check_branch
        %206 = sbr.rel (%p203) target = $region32
      $region31: #{tpu_custom_call.1} parent=5 // pred_region
        %s207 = ssub.s32 %s16, 1
        %s208 = sand.u32 %s43, 1
        %s209 = scalar_lea.sflag [#allocation4], %s208
        %s210 = sand.u32 %s43, 1
        %s211 = smul.addr %s210, 40
        %s212 = scalar_lea.vmem [#allocation3], %s211
        // Predicated region
        $region33: #{tpu_custom_call.1} parent=31 // pred_check
          %p213 = pneg %p56
        $region34: #{tpu_custom_call.1} parent=31 // pred_check_branch
          %215 = sbr.rel (%p213) target = $region36
        $region35: #{tpu_custom_call.1} parent=31 // pred_region
          %216 = dma.done %s209, 640
        $region36: #{tpu_custom_call.1} parent=31 // pred_fallthru
          _
        %s217 = sand.u32 %s21, 1
        %s218 = scalar_lea.sflag [#allocation7], %s217
        %s219 = sand.u32 %s69, 1
        %s220 = smul.addr %s219, 640
        %s221 = scalar_lea.vmem [#allocation6], %s220
        // Predicated region
        $region37: #{tpu_custom_call.1} parent=31 // pred_check
          %p222 = pneg %p82
        $region38: #{tpu_custom_call.1} parent=31 // pred_check_branch
          %224 = sbr.rel (%p222) target = $region40
        $region39: #{tpu_custom_call.1} parent=31 // pred_region
          %225 = dma.done %s218, 10240
        $region40: #{tpu_custom_call.1} parent=31 // pred_fallthru
          _
        // Predicated region
        $region41: #{tpu_custom_call.1} parent=31 // pred_check
          %p226 = pneg %p103
        $region42: #{tpu_custom_call.1} parent=31 // pred_check_branch
          %228 = sbr.rel (%p226) target = $region44
        $region43: #{tpu_custom_call.1} parent=31 // pred_region
          %229 = dma.done [#allocation7], 16
        $region44: #{tpu_custom_call.1} parent=31 // pred_fallthru
          _
        %s230 = sand.u32 %s43, 1
        %s231 = scalar_lea.sflag [#allocation4], %s230
        %s232 = sand.u32 %s43, 1
        %s233 = smul.addr %s232, 40
        %s234 = scalar_lea.vmem [#allocation3], %s233
        %p235 = pneg %p56
        %p236 = pneg %p53
        %s237 = sand.u32 %s21, 1
        %s238 = scalar_lea.sflag [#allocation7], %s237
        %s239 = sand.u32 %s69, 1
        %s240 = smul.addr %s239, 640
        %s241 = scalar_lea.vmem [#allocation6], %s240
        %p242 = pneg %p82
        %p243 = pneg %p79
        %p244 = pneg %p103
        %p245 = pneg %p100
        %p246 = pneg %p129
        %p247 = pneg %p126
        %s248 = smul.u32 10, %s26
        %s249 = smul.u32 160, %s26
        %p251 = scmp.eq.s32.totalorder %s26, 0
        // Predicated region
        $region45: #{tpu_custom_call.1} parent=31 // pred_check
          %p252 = pneg %p251
        $region46: #{tpu_custom_call.1} parent=31 // pred_check_branch
          %254 = sbr.rel (%p252) target = $region48
        $region47: #{tpu_custom_call.1} parent=31 // pred_region
          %255 = vst [vmem:[#allocation2] sm:$0xff] 0.0
        $region48: #{tpu_custom_call.1} parent=31 // pred_fallthru
          _
        %v256 = vld [vmem:[#allocation2] sm:$0xff]
        %v257 = vld [vmem:[%s212] sm:$0xff]
        %v258 = vld [vmem:[%s212 + $0x8] sm:$0xff]
        %v259 = vld [vmem:[%s212 + $0x10] sm:$0xff]
        %v260 = vld [vmem:[%s212 + $0x18] sm:$0xff]
        %v261 = vld [vmem:[%s212 + $0x20] sm:$0xff]
        %v262 = vld [vmem:[%s221] sm:$0xf]
        %v263 = vld [vmem:[%s221 + $0x4] sm:$0xf]
        %v264 = vld [vmem:[%s221 + $0x8] sm:$0xf]
        %v265 = vld [vmem:[%s221 + $0xc] sm:$0xf]
        %v266 = vld [vmem:[%s221 + $0x10] sm:$0xf]
        %v267 = vld [vmem:[%s221 + $0x14] sm:$0xf]
        %v268 = vld [vmem:[%s221 + $0x18] sm:$0xf]
        %v269 = vld [vmem:[%s221 + $0x1c] sm:$0xf]
        %v270 = vld [vmem:[%s221 + $0x20] sm:$0xf]
        %v271 = vld [vmem:[%s221 + $0x24] sm:$0xf]
        %v272 = vld [vmem:[%s221 + $0x28] sm:$0xf]
        %v273 = vld [vmem:[%s221 + $0x2c] sm:$0xf]
        %v274 = vld [vmem:[%s221 + $0x30] sm:$0xf]
        %v275 = vld [vmem:[%s221 + $0x34] sm:$0xf]
        %v276 = vld [vmem:[%s221 + $0x38] sm:$0xf]
        %v277 = vld [vmem:[%s221 + $0x3c] sm:$0xf]
        %v278 = vld [vmem:[%s221 + $0x40] sm:$0xf]
        %v279 = vld [vmem:[%s221 + $0x44] sm:$0xf]
        %v280 = vld [vmem:[%s221 + $0x48] sm:$0xf]
        %v281 = vld [vmem:[%s221 + $0x4c] sm:$0xf]
        %v282 = vld [vmem:[%s221 + $0x50] sm:$0xf]
        %v283 = vld [vmem:[%s221 + $0x54] sm:$0xf]
        %v284 = vld [vmem:[%s221 + $0x58] sm:$0xf]
        %v285 = vld [vmem:[%s221 + $0x5c] sm:$0xf]
        %v286 = vld [vmem:[%s221 + $0x60] sm:$0xf]
        %v287 = vld [vmem:[%s221 + $0x64] sm:$0xf]
        %v288 = vld [vmem:[%s221 + $0x68] sm:$0xf]
        %v289 = vld [vmem:[%s221 + $0x6c] sm:$0xf]
        %v290 = vld [vmem:[%s221 + $0x70] sm:$0xf]
        %v291 = vld [vmem:[%s221 + $0x74] sm:$0xf]
        %v292 = vld [vmem:[%s221 + $0x78] sm:$0xf]
        %v293 = vld [vmem:[%s221 + $0x7c] sm:$0xf]
        %v294 = vld [vmem:[%s221 + $0x80] sm:$0xf]
        %v295 = vld [vmem:[%s221 + $0x84] sm:$0xf]
        %v296 = vld [vmem:[%s221 + $0x88] sm:$0xf]
        %v297 = vld [vmem:[%s221 + $0x8c] sm:$0xf]
        %v298 = vld [vmem:[%s221 + $0x90] sm:$0xf]
        %v299 = vld [vmem:[%s221 + $0x94] sm:$0xf]
        %v300 = vld [vmem:[%s221 + $0x98] sm:$0xf]
        %v301 = vld [vmem:[%s221 + $0x9c] sm:$0xf]
        %v302 = vld [vmem:[%s221 + $0xa0] sm:$0xf]
        %v303 = vld [vmem:[%s221 + $0xa4] sm:$0xf]
        %v304 = vld [vmem:[%s221 + $0xa8] sm:$0xf]
        %v305 = vld [vmem:[%s221 + $0xac] sm:$0xf]
        %v306 = vld [vmem:[%s221 + $0xb0] sm:$0xf]
        %v307 = vld [vmem:[%s221 + $0xb4] sm:$0xf]
        %v308 = vld [vmem:[%s221 + $0xb8] sm:$0xf]
        %v309 = vld [vmem:[%s221 + $0xbc] sm:$0xf]
        %v310 = vld [vmem:[%s221 + $0xc0] sm:$0xf]
        %v311 = vld [vmem:[%s221 + $0xc4] sm:$0xf]
        %v312 = vld [vmem:[%s221 + $0xc8] sm:$0xf]
        %v313 = vld [vmem:[%s221 + $0xcc] sm:$0xf]
        %v314 = vld [vmem:[%s221 + $0xd0] sm:$0xf]
        %v315 = vld [vmem:[%s221 + $0xd4] sm:$0xf]
        %v316 = vld [vmem:[%s221 + $0xd8] sm:$0xf]
        %v317 = vld [vmem:[%s221 + $0xdc] sm:$0xf]
        %v318 = vld [vmem:[%s221 + $0xe0] sm:$0xf]
        %v319 = vld [vmem:[%s221 + $0xe4] sm:$0xf]
        %v320 = vld [vmem:[%s221 + $0xe8] sm:$0xf]
        %v321 = vld [vmem:[%s221 + $0xec] sm:$0xf]
        %v322 = vld [vmem:[%s221 + $0xf0] sm:$0xf]
        %v323 = vld [vmem:[%s221 + $0xf4] sm:$0xf]
        %v324 = vld [vmem:[%s221 + $0xf8] sm:$0xf]
        %v325 = vld [vmem:[%s221 + $0xfc] sm:$0xf]
        %v326 = vld [vmem:[%s221 + $0x100] sm:$0xf]
        %v327 = vld [vmem:[%s221 + $0x104] sm:$0xf]
        %v328 = vld [vmem:[%s221 + $0x108] sm:$0xf]
        %v329 = vld [vmem:[%s221 + $0x10c] sm:$0xf]
        %v330 = vld [vmem:[%s221 + $0x110] sm:$0xf]
        %v331 = vld [vmem:[%s221 + $0x114] sm:$0xf]
        %v332 = vld [vmem:[%s221 + $0x118] sm:$0xf]
        %v333 = vld [vmem:[%s221 + $0x11c] sm:$0xf]
        %v334 = vld [vmem:[%s221 + $0x120] sm:$0xf]
        %v335 = vld [vmem:[%s221 + $0x124] sm:$0xf]
        %v336 = vld [vmem:[%s221 + $0x128] sm:$0xf]
        %v337 = vld [vmem:[%s221 + $0x12c] sm:$0xf]
        %v338 = vld [vmem:[%s221 + $0x130] sm:$0xf]
        %v339 = vld [vmem:[%s221 + $0x134] sm:$0xf]
        %v340 = vld [vmem:[%s221 + $0x138] sm:$0xf]
        %v341 = vld [vmem:[%s221 + $0x13c] sm:$0xf]
        %v342 = vld [vmem:[%s221 + $0x140] sm:$0xf]
        %v343 = vld [vmem:[%s221 + $0x144] sm:$0xf]
        %v344 = vld [vmem:[%s221 + $0x148] sm:$0xf]
        %v345 = vld [vmem:[%s221 + $0x14c] sm:$0xf]
        %v346 = vld [vmem:[%s221 + $0x150] sm:$0xf]
        %v347 = vld [vmem:[%s221 + $0x154] sm:$0xf]
        %v348 = vld [vmem:[%s221 + $0x158] sm:$0xf]
        %v349 = vld [vmem:[%s221 + $0x15c] sm:$0xf]
        %v350 = vld [vmem:[%s221 + $0x160] sm:$0xf]
        %v351 = vld [vmem:[%s221 + $0x164] sm:$0xf]
        %v352 = vld [vmem:[%s221 + $0x168] sm:$0xf]
        %v353 = vld [vmem:[%s221 + $0x16c] sm:$0xf]
        %v354 = vld [vmem:[%s221 + $0x170] sm:$0xf]
        %v355 = vld [vmem:[%s221 + $0x174] sm:$0xf]
        %v356 = vld [vmem:[%s221 + $0x178] sm:$0xf]
        %v357 = vld [vmem:[%s221 + $0x17c] sm:$0xf]
        %v358 = vld [vmem:[%s221 + $0x180] sm:$0xf]
        %v359 = vld [vmem:[%s221 + $0x184] sm:$0xf]
        %v360 = vld [vmem:[%s221 + $0x188] sm:$0xf]
        %v361 = vld [vmem:[%s221 + $0x18c] sm:$0xf]
        %v362 = vld [vmem:[%s221 + $0x190] sm:$0xf]
        %v363 = vld [vmem:[%s221 + $0x194] sm:$0xf]
        %v364 = vld [vmem:[%s221 + $0x198] sm:$0xf]
        %v365 = vld [vmem:[%s221 + $0x19c] sm:$0xf]
        %v366 = vld [vmem:[%s221 + $0x1a0] sm:$0xf]
        %v367 = vld [vmem:[%s221 + $0x1a4] sm:$0xf]
        %v368 = vld [vmem:[%s221 + $0x1a8] sm:$0xf]
        %v369 = vld [vmem:[%s221 + $0x1ac] sm:$0xf]
        %v370 = vld [vmem:[%s221 + $0x1b0] sm:$0xf]
        %v371 = vld [vmem:[%s221 + $0x1b4] sm:$0xf]
        %v372 = vld [vmem:[%s221 + $0x1b8] sm:$0xf]
        %v373 = vld [vmem:[%s221 + $0x1bc] sm:$0xf]
        %v374 = vld [vmem:[%s221 + $0x1c0] sm:$0xf]
        %v375 = vld [vmem:[%s221 + $0x1c4] sm:$0xf]
        %v376 = vld [vmem:[%s221 + $0x1c8] sm:$0xf]
        %v377 = vld [vmem:[%s221 + $0x1cc] sm:$0xf]
        %v378 = vld [vmem:[%s221 + $0x1d0] sm:$0xf]
        %v379 = vld [vmem:[%s221 + $0x1d4] sm:$0xf]
        %v380 = vld [vmem:[%s221 + $0x1d8] sm:$0xf]
        %v381 = vld [vmem:[%s221 + $0x1dc] sm:$0xf]
        %v382 = vld [vmem:[%s221 + $0x1e0] sm:$0xf]
        %v383 = vld [vmem:[%s221 + $0x1e4] sm:$0xf]
        %v384 = vld [vmem:[%s221 + $0x1e8] sm:$0xf]
        %v385 = vld [vmem:[%s221 + $0x1ec] sm:$0xf]
        %v386 = vld [vmem:[%s221 + $0x1f0] sm:$0xf]
        %v387 = vld [vmem:[%s221 + $0x1f4] sm:$0xf]
        %v388 = vld [vmem:[%s221 + $0x1f8] sm:$0xf]
        %v389 = vld [vmem:[%s221 + $0x1fc] sm:$0xf]
        %v390 = vld [vmem:[%s221 + $0x200] sm:$0xf]
        %v391 = vld [vmem:[%s221 + $0x204] sm:$0xf]
        %v392 = vld [vmem:[%s221 + $0x208] sm:$0xf]
        %v393 = vld [vmem:[%s221 + $0x20c] sm:$0xf]
        %v394 = vld [vmem:[%s221 + $0x210] sm:$0xf]
        %v395 = vld [vmem:[%s221 + $0x214] sm:$0xf]
        %v396 = vld [vmem:[%s221 + $0x218] sm:$0xf]
        %v397 = vld [vmem:[%s221 + $0x21c] sm:$0xf]
        %v398 = vld [vmem:[%s221 + $0x220] sm:$0xf]
        %v399 = vld [vmem:[%s221 + $0x224] sm:$0xf]
        %v400 = vld [vmem:[%s221 + $0x228] sm:$0xf]
        %v401 = vld [vmem:[%s221 + $0x22c] sm:$0xf]
        %v402 = vld [vmem:[%s221 + $0x230] sm:$0xf]
        %v403 = vld [vmem:[%s221 + $0x234] sm:$0xf]
        %v404 = vld [vmem:[%s221 + $0x238] sm:$0xf]
        %v405 = vld [vmem:[%s221 + $0x23c] sm:$0xf]
        %v406 = vld [vmem:[%s221 + $0x240] sm:$0xf]
        %v407 = vld [vmem:[%s221 + $0x244] sm:$0xf]
        %v408 = vld [vmem:[%s221 + $0x248] sm:$0xf]
        %v409 = vld [vmem:[%s221 + $0x24c] sm:$0xf]
        %v410 = vld [vmem:[%s221 + $0x250] sm:$0xf]
        %v411 = vld [vmem:[%s221 + $0x254] sm:$0xf]
        %v412 = vld [vmem:[%s221 + $0x258] sm:$0xf]
        %v413 = vld [vmem:[%s221 + $0x25c] sm:$0xf]
        %v414 = vld [vmem:[%s221 + $0x260] sm:$0xf]
        %v415 = vld [vmem:[%s221 + $0x264] sm:$0xf]
        %v416 = vld [vmem:[%s221 + $0x268] sm:$0xf]
        %v417 = vld [vmem:[%s221 + $0x26c] sm:$0xf]
        %v418 = vld [vmem:[%s221 + $0x270] sm:$0xf]
        %v419 = vld [vmem:[%s221 + $0x274] sm:$0xf]
        %v420 = vld [vmem:[%s221 + $0x278] sm:$0xf]
        %v421 = vld [vmem:[%s221 + $0x27c] sm:$0xf]
        %v427 = vunpack.c.l.b16 %v257
        %v428 = vunpack.c.h.b16 %v257
        %v429 = vunpack.c.l.b16 %v258
        %v430 = vunpack.c.h.b16 %v258
        %v431 = vunpack.c.l.b16 %v259
        %v432 = vunpack.c.h.b16 %v259
        %v433 = vunpack.c.l.b16 %v260
        %v434 = vunpack.c.h.b16 %v260
        %v435 = vunpack.c.l.b16 %v261
        %v436 = vunpack.c.h.b16 %v261
        %v437 = vpack.c.b16 %v427, %v427
        %v438 = vpack.c.b16 %v428, %v428
        %v439 = vpack.c.b16 %v429, %v429
        %v440 = vpack.c.b16 %v430, %v430
        %v441 = vpack.c.b16 %v431, %v431
        %v442 = vpack.c.b16 %v432, %v432
        %v443 = vpack.c.b16 %v433, %v433
        %v444 = vpack.c.b16 %v434, %v434
        %v445 = vpack.c.b16 %v435, %v435
        %v446 = vpack.c.b16 %v436, %v436
        %v617 = vunpack.c.l.b16 %v262
        %v618 = vunpack.c.l.b16 %v263
        %v619 = vunpack.c.l.b16 %v264
        %v620 = vunpack.c.l.b16 %v265
        %v621 = vunpack.c.l.b16 %v266
        %v622 = vunpack.c.l.b16 %v267
        %v623 = vunpack.c.l.b16 %v268
        %v624 = vunpack.c.l.b16 %v269
        %v625 = vunpack.c.l.b16 %v270
        %v626 = vunpack.c.l.b16 %v271
        %v627 = vunpack.c.l.b16 %v272
        %v628 = vunpack.c.l.b16 %v273
        %v629 = vunpack.c.l.b16 %v274
        %v630 = vunpack.c.l.b16 %v275
        %v631 = vunpack.c.l.b16 %v276
        %v632 = vunpack.c.l.b16 %v277
        %v633 = vunpack.c.l.b16 %v278
        %v634 = vunpack.c.l.b16 %v279
        %v635 = vunpack.c.l.b16 %v280
        %v636 = vunpack.c.l.b16 %v281
        %v637 = vunpack.c.l.b16 %v282
        %v638 = vunpack.c.l.b16 %v283
        %v639 = vunpack.c.l.b16 %v284
        %v640 = vunpack.c.l.b16 %v285
        %v641 = vunpack.c.l.b16 %v286
        %v642 = vunpack.c.l.b16 %v287
        %v643 = vunpack.c.l.b16 %v288
        %v644 = vunpack.c.l.b16 %v289
        %v645 = vunpack.c.l.b16 %v290
        %v646 = vunpack.c.l.b16 %v291
        %v647 = vunpack.c.l.b16 %v292
        %v648 = vunpack.c.l.b16 %v293
        %v649 = vunpack.c.l.b16 %v294
        %v650 = vunpack.c.l.b16 %v295
        %v651 = vunpack.c.l.b16 %v296
        %v652 = vunpack.c.l.b16 %v297
        %v653 = vunpack.c.l.b16 %v298
        %v654 = vunpack.c.l.b16 %v299
        %v655 = vunpack.c.l.b16 %v300
        %v656 = vunpack.c.l.b16 %v301
        %v657 = vunpack.c.l.b16 %v302
        %v658 = vunpack.c.l.b16 %v303
        %v659 = vunpack.c.l.b16 %v304
        %v660 = vunpack.c.l.b16 %v305
        %v661 = vunpack.c.l.b16 %v306
        %v662 = vunpack.c.l.b16 %v307
        %v663 = vunpack.c.l.b16 %v308
        %v664 = vunpack.c.l.b16 %v309
        %v665 = vunpack.c.l.b16 %v310
        %v666 = vunpack.c.l.b16 %v311
        %v667 = vunpack.c.l.b16 %v312
        %v668 = vunpack.c.l.b16 %v313
        %v669 = vunpack.c.l.b16 %v314
        %v670 = vunpack.c.l.b16 %v315
        %v671 = vunpack.c.l.b16 %v316
        %v672 = vunpack.c.l.b16 %v317
        %v673 = vunpack.c.l.b16 %v318
        %v674 = vunpack.c.l.b16 %v319
        %v675 = vunpack.c.l.b16 %v320
        %v676 = vunpack.c.l.b16 %v321
        %v677 = vunpack.c.l.b16 %v322
        %v678 = vunpack.c.l.b16 %v323
        %v679 = vunpack.c.l.b16 %v324
        %v680 = vunpack.c.l.b16 %v325
        %v681 = vunpack.c.l.b16 %v326
        %v682 = vunpack.c.l.b16 %v327
        %v683 = vunpack.c.l.b16 %v328
        %v684 = vunpack.c.l.b16 %v329
        %v685 = vunpack.c.l.b16 %v330
        %v686 = vunpack.c.l.b16 %v331
        %v687 = vunpack.c.l.b16 %v332
        %v688 = vunpack.c.l.b16 %v333
        %v689 = vunpack.c.l.b16 %v334
        %v690 = vunpack.c.l.b16 %v335
        %v691 = vunpack.c.l.b16 %v336
        %v692 = vunpack.c.l.b16 %v337
        %v693 = vunpack.c.l.b16 %v338
        %v694 = vunpack.c.l.b16 %v339
        %v695 = vunpack.c.l.b16 %v340
        %v696 = vunpack.c.l.b16 %v341
        %v697 = vunpack.c.l.b16 %v342
        %v698 = vunpack.c.l.b16 %v343
        %v699 = vunpack.c.l.b16 %v344
        %v700 = vunpack.c.l.b16 %v345
        %v701 = vunpack.c.l.b16 %v346
        %v702 = vunpack.c.l.b16 %v347
        %v703 = vunpack.c.l.b16 %v348
        %v704 = vunpack.c.l.b16 %v349
        %v705 = vunpack.c.l.b16 %v350
        %v706 = vunpack.c.l.b16 %v351
        %v707 = vunpack.c.l.b16 %v352
        %v708 = vunpack.c.l.b16 %v353
        %v709 = vunpack.c.l.b16 %v354
        %v710 = vunpack.c.l.b16 %v355
        %v711 = vunpack.c.l.b16 %v356
        %v712 = vunpack.c.l.b16 %v357
        %v713 = vunpack.c.l.b16 %v358
        %v714 = vunpack.c.l.b16 %v359
        %v715 = vunpack.c.l.b16 %v360
        %v716 = vunpack.c.l.b16 %v361
        %v717 = vunpack.c.l.b16 %v362
        %v718 = vunpack.c.l.b16 %v363
        %v719 = vunpack.c.l.b16 %v364
        %v720 = vunpack.c.l.b16 %v365
        %v721 = vunpack.c.l.b16 %v366
        %v722 = vunpack.c.l.b16 %v367
        %v723 = vunpack.c.l.b16 %v368
        %v724 = vunpack.c.l.b16 %v369
        %v725 = vunpack.c.l.b16 %v370
        %v726 = vunpack.c.l.b16 %v371
        %v727 = vunpack.c.l.b16 %v372
        %v728 = vunpack.c.l.b16 %v373
        %v729 = vunpack.c.l.b16 %v374
        %v730 = vunpack.c.l.b16 %v375
        %v731 = vunpack.c.l.b16 %v376
        %v732 = vunpack.c.l.b16 %v377
        %v733 = vunpack.c.l.b16 %v378
        %v734 = vunpack.c.l.b16 %v379
        %v735 = vunpack.c.l.b16 %v380
        %v736 = vunpack.c.l.b16 %v381
        %v737 = vunpack.c.l.b16 %v382
        %v738 = vunpack.c.l.b16 %v383
        %v739 = vunpack.c.l.b16 %v384
        %v740 = vunpack.c.l.b16 %v385
        %v741 = vunpack.c.l.b16 %v386
        %v742 = vunpack.c.l.b16 %v387
        %v743 = vunpack.c.l.b16 %v388
        %v744 = vunpack.c.l.b16 %v389
        %v745 = vunpack.c.l.b16 %v390
        %v746 = vunpack.c.l.b16 %v391
        %v747 = vunpack.c.l.b16 %v392
        %v748 = vunpack.c.l.b16 %v393
        %v749 = vunpack.c.l.b16 %v394
        %v750 = vunpack.c.l.b16 %v395
        %v751 = vunpack.c.l.b16 %v396
        %v752 = vunpack.c.l.b16 %v397
        %v753 = vunpack.c.l.b16 %v398
        %v754 = vunpack.c.l.b16 %v399
        %v755 = vunpack.c.l.b16 %v400
        %v756 = vunpack.c.l.b16 %v401
        %v757 = vunpack.c.l.b16 %v402
        %v758 = vunpack.c.l.b16 %v403
        %v759 = vunpack.c.l.b16 %v404
        %v760 = vunpack.c.l.b16 %v405
        %v761 = vunpack.c.l.b16 %v406
        %v762 = vunpack.c.l.b16 %v407
        %v763 = vunpack.c.l.b16 %v408
        %v764 = vunpack.c.l.b16 %v409
        %v765 = vunpack.c.l.b16 %v410
        %v766 = vunpack.c.l.b16 %v411
        %v767 = vunpack.c.l.b16 %v412
        %v768 = vunpack.c.l.b16 %v413
        %v769 = vunpack.c.l.b16 %v414
        %v770 = vunpack.c.l.b16 %v415
        %v771 = vunpack.c.l.b16 %v416
        %v772 = vunpack.c.l.b16 %v417
        %v773 = vunpack.c.l.b16 %v418
        %v774 = vunpack.c.l.b16 %v419
        %v775 = vunpack.c.l.b16 %v420
        %v776 = vunpack.c.l.b16 %v421
        %v777 = vpack.c.b16 %v618, %v617
        %v778 = vpack.c.b16 %v620, %v619
        %v779 = vpack.c.b16 %v622, %v621
        %v780 = vpack.c.b16 %v624, %v623
        %v781 = vpack.c.b16 %v626, %v625
        %v782 = vpack.c.b16 %v628, %v627
        %v783 = vpack.c.b16 %v630, %v629
        %v784 = vpack.c.b16 %v632, %v631
        %v785 = vpack.c.b16 %v634, %v633
        %v786 = vpack.c.b16 %v636, %v635
        %v787 = vpack.c.b16 %v638, %v637
        %v788 = vpack.c.b16 %v640, %v639
        %v789 = vpack.c.b16 %v642, %v641
        %v790 = vpack.c.b16 %v644, %v643
        %v791 = vpack.c.b16 %v646, %v645
        %v792 = vpack.c.b16 %v648, %v647
        %v793 = vpack.c.b16 %v650, %v649
        %v794 = vpack.c.b16 %v652, %v651
        %v795 = vpack.c.b16 %v654, %v653
        %v796 = vpack.c.b16 %v656, %v655
        %v797 = vpack.c.b16 %v658, %v657
        %v798 = vpack.c.b16 %v660, %v659
        %v799 = vpack.c.b16 %v662, %v661
        %v800 = vpack.c.b16 %v664, %v663
        %v801 = vpack.c.b16 %v666, %v665
        %v802 = vpack.c.b16 %v668, %v667
        %v803 = vpack.c.b16 %v670, %v669
        %v804 = vpack.c.b16 %v672, %v671
        %v805 = vpack.c.b16 %v674, %v673
        %v806 = vpack.c.b16 %v676, %v675
        %v807 = vpack.c.b16 %v678, %v677
        %v808 = vpack.c.b16 %v680, %v679
        %v809 = vpack.c.b16 %v682, %v681
        %v810 = vpack.c.b16 %v684, %v683
        %v811 = vpack.c.b16 %v686, %v685
        %v812 = vpack.c.b16 %v688, %v687
        %v813 = vpack.c.b16 %v690, %v689
        %v814 = vpack.c.b16 %v692, %v691
        %v815 = vpack.c.b16 %v694, %v693
        %v816 = vpack.c.b16 %v696, %v695
        %v817 = vpack.c.b16 %v698, %v697
        %v818 = vpack.c.b16 %v700, %v699
        %v819 = vpack.c.b16 %v702, %v701
        %v820 = vpack.c.b16 %v704, %v703
        %v821 = vpack.c.b16 %v706, %v705
        %v822 = vpack.c.b16 %v708, %v707
        %v823 = vpack.c.b16 %v710, %v709
        %v824 = vpack.c.b16 %v712, %v711
        %v825 = vpack.c.b16 %v714, %v713
        %v826 = vpack.c.b16 %v716, %v715
        %v827 = vpack.c.b16 %v718, %v717
        %v828 = vpack.c.b16 %v720, %v719
        %v829 = vpack.c.b16 %v722, %v721
        %v830 = vpack.c.b16 %v724, %v723
        %v831 = vpack.c.b16 %v726, %v725
        %v832 = vpack.c.b16 %v728, %v727
        %v833 = vpack.c.b16 %v730, %v729
        %v834 = vpack.c.b16 %v732, %v731
        %v835 = vpack.c.b16 %v734, %v733
        %v836 = vpack.c.b16 %v736, %v735
        %v837 = vpack.c.b16 %v738, %v737
        %v838 = vpack.c.b16 %v740, %v739
        %v839 = vpack.c.b16 %v742, %v741
        %v840 = vpack.c.b16 %v744, %v743
        %v841 = vpack.c.b16 %v746, %v745
        %v842 = vpack.c.b16 %v748, %v747
        %v843 = vpack.c.b16 %v750, %v749
        %v844 = vpack.c.b16 %v752, %v751
        %v845 = vpack.c.b16 %v754, %v753
        %v846 = vpack.c.b16 %v756, %v755
        %v847 = vpack.c.b16 %v758, %v757
        %v848 = vpack.c.b16 %v760, %v759
        %v849 = vpack.c.b16 %v762, %v761
        %v850 = vpack.c.b16 %v764, %v763
        %v851 = vpack.c.b16 %v766, %v765
        %v852 = vpack.c.b16 %v768, %v767
        %v853 = vpack.c.b16 %v770, %v769
        %v854 = vpack.c.b16 %v772, %v771
        %v855 = vpack.c.b16 %v774, %v773
        %v856 = vpack.c.b16 %v776, %v775
        %937 = vmatprep.subr.bf16.mxu0 0
        %938 = vmatpush1.bf16.msra.mxu0 %v777
        %939 = vmatprep.subr.bf16.mxu0 0
        %940 = vmatpush1.bf16.msra.mxu0 %v778
        %941 = vmatprep.subr.bf16.mxu0 0
        %942 = vmatpush1.bf16.msra.mxu0 %v779
        %943 = vmatprep.subr.bf16.mxu0 0
        %944 = vmatpush1.bf16.msra.mxu0 %v780
        %945 = vmatprep.subr.bf16.mxu0 0
        %946 = vmatpush1.bf16.msra.mxu0 %v781
        %947 = vmatprep.subr.bf16.mxu0 0
        %948 = vmatpush1.bf16.msra.mxu0 %v782
        %949 = vmatprep.subr.bf16.mxu0 0
        %950 = vmatpush1.bf16.msra.mxu0 %v783
        %951 = vmatprep.subr.bf16.mxu0 0
        %952 = vmatpush1.bf16.msra.mxu0 %v784
        %953 = vmatprep.subr.bf16.mxu0 0
        %954 = vmatpush1.bf16.msra.mxu0 %v785
        %955 = vmatprep.subr.bf16.mxu0 0
        %956 = vmatpush1.bf16.msra.mxu0 %v786
        %957 = vmatprep.subr.bf16.mxu0 0
        %958 = vmatpush1.bf16.msra.mxu0 %v787
        %959 = vmatprep.subr.bf16.mxu0 0
        %960 = vmatpush1.bf16.msra.mxu0 %v788
        %961 = vmatprep.subr.bf16.mxu0 0
        %962 = vmatpush1.bf16.msra.mxu0 %v789
        %963 = vmatprep.subr.bf16.mxu0 0
        %964 = vmatpush1.bf16.msra.mxu0 %v790
        %965 = vmatprep.subr.bf16.mxu0 0
        %966 = vmatpush1.bf16.msra.mxu0 %v791
        %967 = vmatprep.subr.bf16.mxu0 0
        %968 = vmatpush1.bf16.msra.mxu0 %v792
        %969 = vmatprep.mubr.bf16.mxu0 %v438
        %970 = vmatmul.mubr.bf16.gmra.mrb[0].mxu0 %v437
        %v971 = vpop.f32.mrb[0].mxu0
        %v972 = vadd.f32 0.0, %v971
        %v973 = vpop.f32.mrb[0].mxu0
        %v974 = vpop.f32.mrb[0].mxu0
        %v975 = vpop.f32.mrb[0].mxu0
        %976 = vdwg.mxu0
        %977 = vmatprep.subr.bf16.mxu0 0
        %978 = vmatpush1.bf16.msra.mxu0 %v793
        %979 = vmatprep.subr.bf16.mxu0 0
        %980 = vmatpush1.bf16.msra.mxu0 %v794
        %981 = vmatprep.subr.bf16.mxu0 0
        %982 = vmatpush1.bf16.msra.mxu0 %v795
        %983 = vmatprep.subr.bf16.mxu0 0
        %984 = vmatpush1.bf16.msra.mxu0 %v796
        %985 = vmatprep.subr.bf16.mxu0 0
        %986 = vmatpush1.bf16.msra.mxu0 %v797
        %987 = vmatprep.subr.bf16.mxu0 0
        %988 = vmatpush1.bf16.msra.mxu0 %v798
        %989 = vmatprep.subr.bf16.mxu0 0
        %990 = vmatpush1.bf16.msra.mxu0 %v799
        %991 = vmatprep.subr.bf16.mxu0 0
        %992 = vmatpush1.bf16.msra.mxu0 %v800
        %993 = vmatprep.subr.bf16.mxu0 0
        %994 = vmatpush1.bf16.msra.mxu0 %v801
        %995 = vmatprep.subr.bf16.mxu0 0
        %996 = vmatpush1.bf16.msra.mxu0 %v802
        %997 = vmatprep.subr.bf16.mxu0 0
        %998 = vmatpush1.bf16.msra.mxu0 %v803
        %999 = vmatprep.subr.bf16.mxu0 0
        %1000 = vmatpush1.bf16.msra.mxu0 %v804
        %1001 = vmatprep.subr.bf16.mxu0 0
        %1002 = vmatpush1.bf16.msra.mxu0 %v805
        %1003 = vmatprep.subr.bf16.mxu0 0
        %1004 = vmatpush1.bf16.msra.mxu0 %v806
        %1005 = vmatprep.subr.bf16.mxu0 0
        %1006 = vmatpush1.bf16.msra.mxu0 %v807
        %1007 = vmatprep.subr.bf16.mxu0 0
        %1008 = vmatpush1.bf16.msra.mxu0 %v808
        %1009 = vmatprep.mubr.bf16.mxu0 %v440
        %1010 = vmatmul.mubr.bf16.gmra.mrb[0].mxu0 %v439
        %v1011 = vpop.f32.mrb[0].mxu0
        %v1012 = vadd.f32 %v972, %v1011
        %v1013 = vpop.f32.mrb[0].mxu0
        %v1014 = vpop.f32.mrb[0].mxu0
        %v1015 = vpop.f32.mrb[0].mxu0
        %1016 = vdwg.mxu0
        %1017 = vmatprep.subr.bf16.mxu0 0
        %1018 = vmatpush1.bf16.msra.mxu0 %v809
        %1019 = vmatprep.subr.bf16.mxu0 0
        %1020 = vmatpush1.bf16.msra.mxu0 %v810
        %1021 = vmatprep.subr.bf16.mxu0 0
        %1022 = vmatpush1.bf16.msra.mxu0 %v811
        %1023 = vmatprep.subr.bf16.mxu0 0
        %1024 = vmatpush1.bf16.msra.mxu0 %v812
        %1025 = vmatprep.subr.bf16.mxu0 0
        %1026 = vmatpush1.bf16.msra.mxu0 %v813
        %1027 = vmatprep.subr.bf16.mxu0 0
        %1028 = vmatpush1.bf16.msra.mxu0 %v814
        %1029 = vmatprep.subr.bf16.mxu0 0
        %1030 = vmatpush1.bf16.msra.mxu0 %v815
        %1031 = vmatprep.subr.bf16.mxu0 0
        %1032 = vmatpush1.bf16.msra.mxu0 %v816
        %1033 = vmatprep.subr.bf16.mxu0 0
        %1034 = vmatpush1.bf16.msra.mxu0 %v817
        %1035 = vmatprep.subr.bf16.mxu0 0
        %1036 = vmatpush1.bf16.msra.mxu0 %v818
        %1037 = vmatprep.subr.bf16.mxu0 0
        %1038 = vmatpush1.bf16.msra.mxu0 %v819
        %1039 = vmatprep.subr.bf16.mxu0 0
        %1040 = vmatpush1.bf16.msra.mxu0 %v820
        %1041 = vmatprep.subr.bf16.mxu0 0
        %1042 = vmatpush1.bf16.msra.mxu0 %v821
        %1043 = vmatprep.subr.bf16.mxu0 0
        %1044 = vmatpush1.bf16.msra.mxu0 %v822
        %1045 = vmatprep.subr.bf16.mxu0 0
        %1046 = vmatpush1.bf16.msra.mxu0 %v823
        %1047 = vmatprep.subr.bf16.mxu0 0
        %1048 = vmatpush1.bf16.msra.mxu0 %v824
        %1049 = vmatprep.mubr.bf16.mxu0 %v442
        %1050 = vmatmul.mubr.bf16.gmra.mrb[0].mxu0 %v441
        %v1051 = vpop.f32.mrb[0].mxu0
        %v1052 = vadd.f32 %v1012, %v1051
        %v1053 = vpop.f32.mrb[0].mxu0
        %v1054 = vpop.f32.mrb[0].mxu0
        %v1055 = vpop.f32.mrb[0].mxu0
        %1056 = vdwg.mxu0
        %1057 = vmatprep.subr.bf16.mxu0 0
        %1058 = vmatpush1.bf16.msra.mxu0 %v825
        %1059 = vmatprep.subr.bf16.mxu0 0
        %1060 = vmatpush1.bf16.msra.mxu0 %v826
        %1061 = vmatprep.subr.bf16.mxu0 0
        %1062 = vmatpush1.bf16.msra.mxu0 %v827
        %1063 = vmatprep.subr.bf16.mxu0 0
        %1064 = vmatpush1.bf16.msra.mxu0 %v828
        %1065 = vmatprep.subr.bf16.mxu0 0
        %1066 = vmatpush1.bf16.msra.mxu0 %v829
        %1067 = vmatprep.subr.bf16.mxu0 0
        %1068 = vmatpush1.bf16.msra.mxu0 %v830
        %1069 = vmatprep.subr.bf16.mxu0 0
        %1070 = vmatpush1.bf16.msra.mxu0 %v831
        %1071 = vmatprep.subr.bf16.mxu0 0
        %1072 = vmatpush1.bf16.msra.mxu0 %v832
        %1073 = vmatprep.subr.bf16.mxu0 0
        %1074 = vmatpush1.bf16.msra.mxu0 %v833
        %1075 = vmatprep.subr.bf16.mxu0 0
        %1076 = vmatpush1.bf16.msra.mxu0 %v834
        %1077 = vmatprep.subr.bf16.mxu0 0
        %1078 = vmatpush1.bf16.msra.mxu0 %v835
        %1079 = vmatprep.subr.bf16.mxu0 0
        %1080 = vmatpush1.bf16.msra.mxu0 %v836
        %1081 = vmatprep.subr.bf16.mxu0 0
        %1082 = vmatpush1.bf16.msra.mxu0 %v837
        %1083 = vmatprep.subr.bf16.mxu0 0
        %1084 = vmatpush1.bf16.msra.mxu0 %v838
        %1085 = vmatprep.subr.bf16.mxu0 0
        %1086 = vmatpush1.bf16.msra.mxu0 %v839
        %1087 = vmatprep.subr.bf16.mxu0 0
        %1088 = vmatpush1.bf16.msra.mxu0 %v840
        %1089 = vmatprep.mubr.bf16.mxu0 %v444
        %1090 = vmatmul.mubr.bf16.gmra.mrb[0].mxu0 %v443
        %v1091 = vpop.f32.mrb[0].mxu0
        %v1092 = vadd.f32 %v1052, %v1091
        %v1093 = vpop.f32.mrb[0].mxu0
        %v1094 = vpop.f32.mrb[0].mxu0
        %v1095 = vpop.f32.mrb[0].mxu0
        %1096 = vdwg.mxu0
        %1097 = vmatprep.subr.bf16.mxu0 0
        %1098 = vmatpush1.bf16.msra.mxu0 %v841
        %1099 = vmatprep.subr.bf16.mxu0 0
        %1100 = vmatpush1.bf16.msra.mxu0 %v842
        %1101 = vmatprep.subr.bf16.mxu0 0
        %1102 = vmatpush1.bf16.msra.mxu0 %v843
        %1103 = vmatprep.subr.bf16.mxu0 0
        %1104 = vmatpush1.bf16.msra.mxu0 %v844
        %1105 = vmatprep.subr.bf16.mxu0 0
        %1106 = vmatpush1.bf16.msra.mxu0 %v845
        %1107 = vmatprep.subr.bf16.mxu0 0
        %1108 = vmatpush1.bf16.msra.mxu0 %v846
        %1109 = vmatprep.subr.bf16.mxu0 0
        %1110 = vmatpush1.bf16.msra.mxu0 %v847
        %1111 = vmatprep.subr.bf16.mxu0 0
        %1112 = vmatpush1.bf16.msra.mxu0 %v848
        %1113 = vmatprep.subr.bf16.mxu0 0
        %1114 = vmatpush1.bf16.msra.mxu0 %v849
        %1115 = vmatprep.subr.bf16.mxu0 0
        %1116 = vmatpush1.bf16.msra.mxu0 %v850
        %1117 = vmatprep.subr.bf16.mxu0 0
        %1118 = vmatpush1.bf16.msra.mxu0 %v851
        %1119 = vmatprep.subr.bf16.mxu0 0
        %1120 = vmatpush1.bf16.msra.mxu0 %v852
        %1121 = vmatprep.subr.bf16.mxu0 0
        %1122 = vmatpush1.bf16.msra.mxu0 %v853
        %1123 = vmatprep.subr.bf16.mxu0 0
        %1124 = vmatpush1.bf16.msra.mxu0 %v854
        %1125 = vmatprep.subr.bf16.mxu0 0
        %1126 = vmatpush1.bf16.msra.mxu0 %v855
        %1127 = vmatprep.subr.bf16.mxu0 0
        %1128 = vmatpush1.bf16.msra.mxu0 %v856
        %1129 = vmatprep.mubr.bf16.mxu0 %v446
        %1130 = vmatmul.mubr.bf16.gmra.mrb[0].mxu0 %v445
        %v1131 = vpop.f32.mrb[0].mxu0
        %v1132 = vadd.f32 %v1092, %v1131
        %v1133 = vpop.f32.mrb[0].mxu0
        %v1134 = vpop.f32.mrb[0].mxu0
        %v1135 = vpop.f32.mrb[0].mxu0
        %1136 = vdwg.mxu0
        %v1137 = vadd.f32 %v256, %v1132
        %1138 = vst [vmem:[#allocation2] sm:$0xff] %v1137
        %p1139 = scmp.eq.s32.totalorder %s26, 7
        // Predicated region
        $region49: #{tpu_custom_call.1} parent=31 // pred_check
          %p1140 = pneg %p1139
        $region50: #{tpu_custom_call.1} parent=31 // pred_check_branch
          %1142 = sbr.rel (%p1140) target = $region52
        $region51: #{tpu_custom_call.1} parent=31 // pred_region
          %v1143 = vld [vmem:[#allocation2] sm:$0xff]
          %v1144 = vld [vmem:[#allocation8] sm:$0x1]
          %v1146 = vlaneseq
          %v1147 = vshrl.u32 %v1146, 7
          %v1148 = vsub.s32 0, %v1147
          %v1149 = vrot.slane %v1144, %v1148
          %v1151 = vadd.f32 %v1143, %v1149
          %v1152 = vmax.f32 %v1151, 0.0
          %v1153 = vlaneseq
          %v1154 = vand.u32 %v1153, 127
          %vm1155 = vcmp.lt.s32.totalorder %v1154, 65
          %v1156 = vsel %vm1155, %v1152, -inf
          %1157 = vmax.xlane.f32.xlu0 %v1156
          %v1158 = vpop.xlane.xlu0 %1157
          %v1159 = vsub.f32 %v1156, %v1158
          %v1160 = vmul.f32 %v1159, 1.442695
          %v1161 = vpow.pop %v1160
          %1162 = vadd.xlane.f32.xlu0 %v1161
          %v1163 = vpop.xlane.xlu0 %1162
          %v1164 = vlog2.pop %v1163
          %v1165 = vmul.f32 %v1164, 0.6931472
          %v1166 = vsub.f32 %v1159, %v1165
          %1167 = vst [vmem:[#allocation9] sm:$0xff] %v1166
        $region52: #{tpu_custom_call.1} parent=31 // pred_fallthru
          _
        // Predicated region
        $region53: #{tpu_custom_call.1} parent=31 // pred_check
          %p1168 = pneg %p126
        $region54: #{tpu_custom_call.1} parent=31 // pred_check_branch
          %1170 = sbr.rel (%p1168) target = $region56
        $region55: #{tpu_custom_call.1} parent=31 // pred_region
          %s1172 = ssub.s32 128, 128
          %1173 = vsyncadd [#allocation5], %s1172
          %s1174 = smul.addr %s25, 128
          %s1175 = scalar_lea.hbm %s3, %s1174
          %s1177 = sshll.u32 [#allocation9], 4
          %s1178 = int_to_ptr.vmem [resolvable:$true] %s1177
          %1180 = dma.vmem_to_hbm [thread:$0]  %s1178, 128, %s1175, [#allocation5]
        $region56: #{tpu_custom_call.1} parent=31 // pred_fallthru
          _
        // Predicated region
        $region57: #{tpu_custom_call.1} parent=31 // pred_check
          %p1181 = pneg %p126
        $region58: #{tpu_custom_call.1} parent=31 // pred_check_branch
          %1183 = sbr.rel (%p1181) target = $region60
        $region59: #{tpu_custom_call.1} parent=31 // pred_region
          %1184 = dma.done [#allocation5], 128
        $region60: #{tpu_custom_call.1} parent=31 // pred_fallthru
          _
      $region32: #{tpu_custom_call.1} parent=5 // pred_fallthru
        _
      %p1185 = scmp.le.s32.totalorder 2, %s16
      // Predicated region
      $region61: #{tpu_custom_call.1} parent=5 // pred_check
        %p1186 = pneg %p1185
      $region62: #{tpu_custom_call.1} parent=5 // pred_check_branch
        %1188 = sbr.rel (%p1186) target = $region64
      $region63: #{tpu_custom_call.1} parent=5 // pred_region
        %s1189 = ssub.s32 %s16, 2
      $region64: #{tpu_custom_call.1} parent=5 // pred_fallthru
        _
    $region6: #{tpu_custom_call.1} parent=1 // loop_footer
      %s20 = sadd.s32 1, %s16
    $region7: #{tpu_custom_call.1} parent=1 // loop_footer_branch
      %15 = sbr.rel target = $region3
    $region8: #{tpu_custom_call.1} parent=1 // loop_exit
      _
    %1190 = vsyncpa [#allocation4], 1
    %s1191 = scalar_lea.sflag [#allocation4], 1
    %1192 = vsyncpa %s1191, 1
    %1193 = vsyncpa [#allocation7], 1
    %s1194 = scalar_lea.sflag [#allocation7], 1
    %1195 = vsyncpa %s1194, 1
    %1196 = vsyncpa [#allocation5], 1
    %s1197 = scalar_lea.sflag [#allocation5], 1
    %1198 = vsyncpa %s1197, 1

</llo_original>
